<compile_context>
chip_gen: v7x
topology: tpu7x:2x2x1
jax: 0.10.0
libtpu: 0.0.40
codegen_flags: <defaults>
</compile_context>

<pallas_src>
import jax
import jax.numpy as jnp
from jax.experimental import pallas as pl
from jax.experimental.pallas import tpu as pltpu


def _fiim_add_kernel(x_ref, y_ref, o_ref):
    # Pure elementwise hot path: one VPU add per vreg, lane-dense load/store.
    o_ref[...] = x_ref[...] + y_ref[...]


# ---------------------------------------------------------------------------
# Layout helpers
# ---------------------------------------------------------------------------

def _sublane_quantum(itemsize: int) -> int:
    # f32 -> 8, bf16 -> 16, int8/fp8 -> 32 (sub-32-bit dtypes pack sublanes).
    return 8 * max(1, 4 // itemsize)


def _choose_slab(total: int, sub: int):
    """Pick a lane-dense 2-D slab (rows, lane) with lane % 128 == 0 and
    rows % sub == 0.  Prefer wide lanes (better unmasked vst utilization and
    fewer, larger DMA rows)."""
    for lane in (4096, 2048, 1024, 512, 256, 128):
        if total % lane == 0:
            rows = total // lane
            if rows % sub == 0:
                return rows, lane
    return None


def _largest_row_tile(rows: int, lane: int, itemsize: int, sub: int,
                      target_bytes: int) -> int:
    """Largest divisor of `rows` that is a multiple of `sub` and keeps the
    per-operand tile <= target_bytes (so the grid divides evenly and every
    block is a full, unmasked tile)."""
    cap = max(sub, (target_bytes // (lane * itemsize)) // sub * sub)
    m = rows // sub
    best = sub
    d = 1
    while d * d <= m:
        if m % d == 0:
            for t in (d * sub, (m // d) * sub):
                if best < t <= cap:
                    best = t
        d += 1
    return best


# ---------------------------------------------------------------------------
# Public wrapper
# ---------------------------------------------------------------------------

# Below this many bytes per operand, plain fused XLA is strictly faster than a
# pallas_call (launch + DMA setup + blocked fusion dominate).
_SMALL_BYTES = 1 << 20          # 1 MiB
# Per-operand tile target: 4 MiB -> 24 MiB VMEM with 3 operands double-buffered.
_TILE_TARGET_BYTES = 4 << 20
_VMEM_LIMIT_BYTES = 32 * 1024 * 1024


def fiim(x, y, *, force_pallas: bool = False):
    """FIIM forward: result = x + y for feature maps of identical shape."""
    assert x.shape == y.shape and x.dtype == y.dtype

    itemsize = jnp.dtype(x.dtype).itemsize
    total = 1
    for d in x.shape:
        total *= d
    total_bytes = total * itemsize

    # Tiny problem: let XLA fuse it (see perf notes at top of file).
    if total_bytes < _SMALL_BYTES and not force_pallas:
        return x + y

    sub = _sublane_quantum(itemsize)
    slab = _choose_slab(total, sub)
    if slab is None:
        # Cannot form a lane-dense (sub, 128)-aligned slab without padding;
        # fall back to fused XLA rather than masked/strided Pallas access.
        return x + y

    rows, lane = slab
    tile_r = _largest_row_tile(rows, lane, itemsize, sub, _TILE_TARGET_BYTES)
    grid = (rows // tile_r,)

    x2 = x.reshape(rows, lane)
    y2 = y.reshape(rows, lane)

    block = pl.BlockSpec((tile_r, lane), lambda i: (i, 0))

    # NOTE: input_output_aliases={0: 0} would write the result in place over x
    # and save an HBM output buffer; omitted so callers can keep using x.
    out2 = pl.pallas_call(
        _fiim_add_kernel,
        out_shape=jax.ShapeDtypeStruct((rows, lane), x.dtype),
        grid=grid,
        in_specs=[block, block],
        out_specs=block,
        compiler_params=pltpu.CompilerParams(
            # Independent elementwise axis: "parallel" lets the runtime shard
            # grid steps across v7x's two TensorCores.
            dimension_semantics=("parallel",),
            # Explicit headroom: 24 MiB of double-buffered tiles must fit even
            # under v5e's 16 MiB scoped default; 32 MiB still fits v7x's
            # 64 MiB physical VMEM.
            vmem_limit_bytes=_VMEM_LIMIT_BYTES,
        ),
    )(x2, y2)

    return out2.reshape(x.shape)


if __name__ == "__main__":
    key = jax.random.PRNGKey(0)
    kx, ky = jax.random.split(key)

    # Small NCHW shapes consistent with the module: batch=2, channels=4, 16x16.
    x = jax.random.normal(kx, (2, 4, 16, 16), dtype=jnp.float32)
    y = jax.random.normal(ky, (2, 4, 16, 16), dtype=jnp.float32)

    # Force the Pallas path so the kernel itself is exercised at the demo size
    # (the production wrapper would route this tiny input to plain XLA x + y).
    out = fiim(x, y, force_pallas=True)
    jax.block_until_ready(out)
    assert out.shape == (2, 4, 16, 16)
    assert jnp.allclose(out, x + y, atol=1e-6)

    # Moderate-size check that exercises the tiled, multi-step (pipelined,
    # megacore-shardable) grid path: 8 MiB/operand -> slab (512, 4096),
    # tile (256, 4096) = 4 MiB/operand, grid = (2,).
    xb = jax.random.normal(kx, (8, 16, 128, 128), dtype=jnp.float32)
    yb = jax.random.normal(ky, (8, 16, 128, 128), dtype=jnp.float32)
    outb = fiim(xb, yb)
    jax.block_until_ready(outb)
    assert jnp.allclose(outb, xb + yb, atol=1e-6)

    print("KERNEL_OK")
</pallas_src>

<mosaic_0001>
module attributes {stable_mosaic.version = 11 : i64} {
  func.func @_fiim_add_kernel(%arg0: i32, %arg1: memref<8x256xf32, #tpu.memory_space<vmem>>, %arg2: memref<8x256xf32, #tpu.memory_space<vmem>>, %arg3: memref<8x256xf32, #tpu.memory_space<vmem>>) attributes {dimension_semantics = [#tpu.dimension_semantics<parallel>], iteration_bounds = array<i64: 1>, scalar_prefetch = 0 : i64, scratch_operands = 0 : i64, tpu.core_type = #tpu.core_type<tc>, window_params = [{transform_indices = @transform_0, window_bounds = array<i64: 8, 256>}, {transform_indices = @transform_1, window_bounds = array<i64: 8, 256>}, {transform_indices = @transform_2, window_bounds = array<i64: 8, 256>}]} {
    %c0 = arith.constant 0 : index
    %c0_0 = arith.constant 0 : index
    %0 = vector.load %arg1[%c0, %c0_0] : memref<8x256xf32, #tpu.memory_space<vmem>>, vector<8x256xf32>
    %c0_1 = arith.constant 0 : index
    %c0_2 = arith.constant 0 : index
    %1 = vector.load %arg2[%c0_1, %c0_2] : memref<8x256xf32, #tpu.memory_space<vmem>>, vector<8x256xf32>
    %2 = arith.addf %0, %1 : vector<8x256xf32>
    %c0_3 = arith.constant 0 : index
    %c0_4 = arith.constant 0 : index
    %3 = vector.load %arg3[%c0_3, %c0_4] : memref<8x256xf32, #tpu.memory_space<vmem>>, vector<8x256xf32>
    tpu.vector_store %arg3[%c0_3, %c0_4], %2 {strides = array<i32>} : memref<8x256xf32, #tpu.memory_space<vmem>>, vector<8x256xf32>,
    return
  }
  func.func @transform_0(%arg0: i32) -> (i32, i32) {
    %c0_i32 = arith.constant 0 : i32
    %c0_i32_0 = arith.constant 0 : i32
    return %arg0, %c0_i32 : i32, i32
  }
  func.func @transform_1(%arg0: i32) -> (i32, i32) {
    %c0_i32 = arith.constant 0 : i32
    %c0_i32_0 = arith.constant 0 : i32
    return %arg0, %c0_i32 : i32, i32
  }
  func.func @transform_2(%arg0: i32) -> (i32, i32) {
    %c0_i32 = arith.constant 0 : i32
    %c0_i32_0 = arith.constant 0 : i32
    return %arg0, %c0_i32 : i32, i32
  }
}

</mosaic_0001>

<llo_original>
// kernel: tpu_custom_call.1
$region0: #{tpu_custom_call.1}
  #allocation0 [shape = 'u32[]', space=smem, size = 0x4, offset = 0x4, fixed_abs, tag = 'smem constant byte address 0x4 - core index']
  #allocation1 [shape = 'u32[144,128]{1,0:T(1,128)}', space=vmem, size = 0x12000, scoped, tag = 'internal scratch']
  %s0 = inlined_call_operand.hbm [shape: f32[8,256], index: 0, kind: input, shape index: {}]
  %s1 = inlined_call_operand.hbm [shape: f32[8,256], index: 1, kind: input, shape index: {}]
  %s2 = inlined_call_operand.hbm [shape: f32[8,256], index: 2, kind: output, shape index: {}]
  %s3 = sld [smem:[#allocation0]]
  $region26: #{tpu_custom_call.1} parent=0
    _
  %s5 = ssub.s32 1, %s3
  %s6 = scalar_select 0, %s5, %s3
  $region1: #{tpu_custom_call.1} parent=0
    #allocation2 [shape = 'u8[8192]{0}', space=vmem, size = 0x2000, scoped, tag = 'input window, operand 0, single buffered']
    #allocation3 [shape = 's32[1]{0}', space=sflag, size = 0x4, scoped, tag = 'scoped memory for tpu_custom_call.1']
    #allocation4 [shape = 's32[1]{0}', space=sflag, size = 0x4, scoped, tag = 'scoped memory for tpu_custom_call.1']
    #allocation5 [shape = 'u8[8192]{0}', space=vmem, size = 0x2000, scoped, tag = 'input window, operand 1, single buffered']
    #allocation6 [shape = 's32[1]{0}', space=sflag, size = 0x4, scoped, tag = 'scoped memory for tpu_custom_call.1']
    #allocation7 [shape = 'u8[8192]{0}', space=vmem, size = 0x2000, scoped, tag = 'output window, operand 0, single buffered']
    %7 = vsyncpa [#allocation3], 0
    %8 = vsyncpa [#allocation6], 0
    %9 = vsyncpa [#allocation4], 0
    // Predicated region
    $region2: #{tpu_custom_call.1} parent=1 // pred_check
      _
    $region3: #{tpu_custom_call.1} parent=1 // pred_check_branch
      %11 = sbr.rel (0) target = $region5
    $region4: #{tpu_custom_call.1} parent=1 // pred_region
      %s13 = ssub.s32 256, 256
      %14 = vsyncadd [#allocation3], %s13
      %s16 = sshll.u32 [#allocation2], 4
      %s17 = int_to_ptr.vmem [resolvable:$true] %s16
      %19 = dma.hbm_to_vmem [thread:$0]  %s0, 256, %s17, [#allocation3]
    $region5: #{tpu_custom_call.1} parent=1 // pred_fallthru
      _
    // Predicated region
    $region6: #{tpu_custom_call.1} parent=1 // pred_check
      _
    $region7: #{tpu_custom_call.1} parent=1 // pred_check_branch
      %21 = sbr.rel (0) target = $region9
    $region8: #{tpu_custom_call.1} parent=1 // pred_region
      %s23 = ssub.s32 256, 256
      %24 = vsyncadd [#allocation6], %s23
      %s26 = sshll.u32 [#allocation5], 4
      %s27 = int_to_ptr.vmem [resolvable:$true] %s26
      %29 = dma.hbm_to_vmem [thread:$0]  %s1, 256, %s27, [#allocation6]
    $region9: #{tpu_custom_call.1} parent=1 // pred_fallthru
      _
    // Predicated region
    $region10: #{tpu_custom_call.1} parent=1 // pred_check
      _
    $region11: #{tpu_custom_call.1} parent=1 // pred_check_branch
      %31 = sbr.rel (0) target = $region13
    $region12: #{tpu_custom_call.1} parent=1 // pred_region
      %32 = dma.done [#allocation3], 256
    $region13: #{tpu_custom_call.1} parent=1 // pred_fallthru
      _
    // Predicated region
    $region14: #{tpu_custom_call.1} parent=1 // pred_check
      _
    $region15: #{tpu_custom_call.1} parent=1 // pred_check_branch
      %34 = sbr.rel (0) target = $region17
    $region16: #{tpu_custom_call.1} parent=1 // pred_region
      %35 = dma.done [#allocation6], 256
    $region17: #{tpu_custom_call.1} parent=1 // pred_fallthru
      _
    %v36 = vld [vmem:[#allocation2] sm:$0xff]
    %v37 = vld [vmem:[#allocation2 + $0x8] sm:$0xff]
    %v38 = vld [vmem:[#allocation5] sm:$0xff]
    %v39 = vld [vmem:[#allocation5 + $0x8] sm:$0xff]
    %v40 = vadd.f32 %v36, %v38
    %v41 = vadd.f32 %v37, %v39
    %42 = vst [vmem:[#allocation7] sm:$0xff] %v40
    %43 = vst [vmem:[#allocation7 + $0x8] sm:$0xff] %v41
    // Predicated region
    $region18: #{tpu_custom_call.1} parent=1 // pred_check
      _
    $region19: #{tpu_custom_call.1} parent=1 // pred_check_branch
      %45 = sbr.rel (0) target = $region21
    $region20: #{tpu_custom_call.1} parent=1 // pred_region
      %s47 = ssub.s32 256, 256
      %48 = vsyncadd [#allocation4], %s47
      %s50 = sshll.u32 [#allocation7], 4
      %s51 = int_to_ptr.vmem [resolvable:$true] %s50
      %53 = dma.vmem_to_hbm [thread:$0]  %s51, 256, %s2, [#allocation4]
    $region21: #{tpu_custom_call.1} parent=1 // pred_fallthru
      _
    // Predicated region
    $region22: #{tpu_custom_call.1} parent=1 // pred_check
      _
    $region23: #{tpu_custom_call.1} parent=1 // pred_check_branch
      %55 = sbr.rel (0) target = $region25
    $region24: #{tpu_custom_call.1} parent=1 // pred_region
      %56 = dma.done [#allocation4], 256
    $region25: #{tpu_custom_call.1} parent=1 // pred_fallthru
      _
    %57 = vsyncpa [#allocation3], 1
    %58 = vsyncpa [#allocation6], 1
    %59 = vsyncpa [#allocation4], 1

</llo_original>
